<compile_context>
chip_gen: v5e
topology: v5e:2x2
jax: 0.10.0
libtpu: 0.0.40
codegen_flags: <defaults>
</compile_context>

<pallas_src>
import functools

import jax
import jax.numpy as jnp
from jax.experimental import pallas as pl
from jax.experimental.pallas import tpu as pltpu


def _round_up(x: int, m: int) -> int:
    return (x + m - 1) // m * m


def _mlp_kernel(x_ref, w1_ref, b1_ref, w2_ref, b2_ref, o_ref):
    # Cast states to the matmul compute dtype in-kernel (no extra HBM pass).
    x = x_ref[...].astype(w1_ref.dtype)
    # hidden = tanh(x @ W1 + b1)        (MXU matmul, f32 accumulate; VPU/EUP tanh)
    h = jnp.dot(x, w1_ref[...], preferred_element_type=jnp.float32)
    h = jnp.tanh(h + b1_ref[...])
    # out = h @ W2 + b2                 (output_scale already folded into W2/b2)
    h = h.astype(w2_ref.dtype)
    o = jnp.dot(h, w2_ref[...], preferred_element_type=jnp.float32)
    o_ref[...] = (o + b2_ref[...]).astype(o_ref.dtype)


def prepare_params(w1, b1, w2, b2, output_scale=1.0,
                   compute_dtype=jnp.float32):
    """Host-side parameter setup (done once, not per call).

    Folds output_scale into the second layer and casts weights to the matmul
    compute dtype (f32 or bf16; bf16 is fine on v5e/v6e/v7x).  No padding of
    the output dimension: the HBM output stays lane-unpadded.
    """
    return dict(
        w1=w1.astype(compute_dtype),
        b1=b1.astype(jnp.float32),
        w2=(w2 * output_scale).astype(compute_dtype),
        b2=(b2 * output_scale).astype(jnp.float32),
    )


def _sublane_multiple(*dtypes) -> int:
    itemsize = min(jnp.dtype(d).itemsize for d in dtypes)
    if itemsize <= 1:
        return 32
    if itemsize == 2:
        return 16
    return 8


@functools.partial(jax.jit, static_argnames=("block_b",))
def instantiator_output(states, params, *, block_b: int = 4096):
    """Pallas equivalent of Model._get_instantiator_output (input type 0)."""
    w1, b1, w2, b2 = params["w1"], params["b1"], params["w2"], params["b2"]

    B, D_in = states.shape
    H = w1.shape[1]
    A = w2.shape[1]
    assert w1.shape == (D_in, H) and b1.shape == (1, H)
    assert w2.shape == (H, A) and b2.shape == (1, A)

    # Batch tile: multiple of the sublane packing width, capped so there are
    # at least ~4 grid steps (keeps both v7x TensorCores + the pipeline busy),
    # never larger than block_b nor than the (rounded-up) batch itself.
    mult = _sublane_multiple(states.dtype, w1.dtype)
    TB = _round_up(pl.cdiv(B, 4), mult)
    TB = max(mult, min(block_b, TB, _round_up(B, mult)))

    grid = (pl.cdiv(B, TB),)   # last block may be partial; writes are masked

    out = pl.pallas_call(
        _mlp_kernel,
        out_shape=jax.ShapeDtypeStruct((B, A), jnp.float32),
        grid_spec=pl.GridSpec(
            grid=grid,
            in_specs=[
                pl.BlockSpec((TB, D_in), lambda i: (i, 0)),   # states: batch-tiled
                pl.BlockSpec((D_in, H), lambda i: (0, 0)),    # W1: resident
                pl.BlockSpec((1, H), lambda i: (0, 0)),       # b1: resident
                pl.BlockSpec((H, A), lambda i: (0, 0)),       # W2 (scale folded)
                pl.BlockSpec((1, A), lambda i: (0, 0)),       # b2 (scale folded)
            ],
            out_specs=pl.BlockSpec((TB, A), lambda i: (i, 0)),
        ),
        compiler_params=pltpu.CompilerParams(
            dimension_semantics=("parallel",)),   # shards across TCs on v7x
    )(states, w1, b1, w2, b2)

    return out


def _reference(states, w1, b1, w2, b2, output_scale):
    s = states.astype(jnp.float32)
    return (jnp.tanh(s @ w1 + b1) @ w2 + b2) * output_scale


if __name__ == "__main__":
    # Synthetic "spaces": num_observations = 32, num_actions = 4, hidden = 32.
    D_IN, H, A = 32, 32, 4
    OUTPUT_SCALE = 2.0  # exercise scale folding (Model default is 1.0)

    key = jax.random.PRNGKey(0)
    k_x, k_xl, k_w1, k_b1, k_w2, k_b2 = jax.random.split(key, 6)

    w1 = jax.random.normal(k_w1, (D_IN, H), dtype=jnp.float32) * 0.1
    b1 = jax.random.normal(k_b1, (1, H), dtype=jnp.float32) * 0.01
    w2 = jax.random.normal(k_w2, (H, A), dtype=jnp.float32) * 0.1
    b2 = jax.random.normal(k_b2, (1, A), dtype=jnp.float32) * 0.01

    # --- small batch, f32 compute: tight parity with the reference ----------
    B_small = 8
    states_small = jax.random.normal(k_x, (B_small, D_IN), dtype=jnp.float32)
    params_f32 = prepare_params(w1, b1, w2, b2, OUTPUT_SCALE,
                                compute_dtype=jnp.float32)
    out_small = jax.block_until_ready(
        instantiator_output(states_small, params_f32))
    ref_small = _reference(states_small, w1, b1, w2, b2, OUTPUT_SCALE)
    assert out_small.shape == (B_small, A)
    assert jnp.allclose(out_small, ref_small, atol=1e-5, rtol=1e-5)

    # --- larger batch: exercises batch tiling (grid=4) + partial last block -
    B_large = 1000   # -> TB = 256, grid = (4,), last block partial (232 rows)
    states_large = jax.random.normal(k_xl, (B_large, D_IN), dtype=jnp.float32)
    out_large = jax.block_until_ready(
        instantiator_output(states_large, params_f32))
    ref_large = _reference(states_large, w1, b1, w2, b2, OUTPUT_SCALE)
    assert out_large.shape == (B_large, A)
    assert jnp.allclose(out_large, ref_large, atol=1e-5, rtol=1e-5)

    # --- bf16 path: bf16 states end-to-end + bf16 weights, f32 accumulation -
    params_bf16 = prepare_params(w1, b1, w2, b2, OUTPUT_SCALE,
                                 compute_dtype=jnp.bfloat16)
    states_bf16 = states_large.astype(jnp.bfloat16)   # caller supplies bf16
    out_bf16 = jax.block_until_ready(
        instantiator_output(states_bf16, params_bf16))
    assert out_bf16.shape == (B_large, A)
    assert jnp.allclose(out_bf16, ref_large, atol=3e-2, rtol=3e-2)

    # TODO(synk): forward()/act()/compute() in the base class raise
    # NotImplementedError and random_act()/save()/load()/update_parameters()
    # are non-tensor glue; only the instantiator-output compute path is
    # kernelized.
    print("KERNEL_OK")
</pallas_src>

<mosaic_0001>
module attributes {stable_mosaic.version = 11 : i64} {
  func.func @_mlp_kernel(%arg0: i32, %arg1: memref<8x32xf32, #tpu.memory_space<vmem>>, %arg2: memref<32x32xf32, #tpu.memory_space<vmem>>, %arg3: memref<1x32xf32, #tpu.memory_space<vmem>>, %arg4: memref<32x4xf32, #tpu.memory_space<vmem>>, %arg5: memref<1x4xf32, #tpu.memory_space<vmem>>, %arg6: memref<8x4xf32, #tpu.memory_space<vmem>>) attributes {dimension_semantics = [#tpu.dimension_semantics<parallel>], iteration_bounds = array<i64: 1>, scalar_prefetch = 0 : i64, scratch_operands = 0 : i64, tpu.core_type = #tpu.core_type<tc>, window_params = [{transform_indices = @transform_0, window_bounds = array<i64: 8, 32>}, {pipeline_mode = #tpu.pipeline_mode<synchronous>, transform_indices = @transform_1, window_bounds = array<i64: 32, 32>}, {pipeline_mode = #tpu.pipeline_mode<synchronous>, transform_indices = @transform_2, window_bounds = array<i64: 1, 32>}, {pipeline_mode = #tpu.pipeline_mode<synchronous>, transform_indices = @transform_3, window_bounds = array<i64: 32, 4>}, {pipeline_mode = #tpu.pipeline_mode<synchronous>, transform_indices = @transform_4, window_bounds = array<i64: 1, 4>}, {transform_indices = @transform_5, window_bounds = array<i64: 8, 4>}]} {
    %c0 = arith.constant 0 : index
    %c0_0 = arith.constant 0 : index
    %0 = vector.load %arg1[%c0, %c0_0] : memref<8x32xf32, #tpu.memory_space<vmem>>, vector<8x32xf32>
    %c0_1 = arith.constant 0 : index
    %c0_2 = arith.constant 0 : index
    %1 = vector.load %arg2[%c0_1, %c0_2] : memref<32x32xf32, #tpu.memory_space<vmem>>, vector<32x32xf32>
    %cst = arith.constant dense<0.000000e+00> : vector<8x32xf32>
    %2 = tpu.matmul %0, %1, %cst {dimension_numbers = #tpu.dot_dimension_numbers<[1], [0], [0], [1], [0, 0, 1, 1], [], []>} : vector<8x32xf32>, vector<32x32xf32>, vector<8x32xf32> -> vector<8x32xf32>
    %c0_3 = arith.constant 0 : index
    %c0_4 = arith.constant 0 : index
    %3 = vector.load %arg3[%c0_3, %c0_4] : memref<1x32xf32, #tpu.memory_space<vmem>>, vector<1x32xf32>
    %4 = vector.broadcast %3 : vector<1x32xf32> to vector<8x32xf32>
    %5 = arith.addf %2, %4 : vector<8x32xf32>
    %6 = math.tanh %5 : vector<8x32xf32>
    %c0_5 = arith.constant 0 : index
    %c0_6 = arith.constant 0 : index
    %7 = vector.load %arg4[%c0_5, %c0_6] : memref<32x4xf32, #tpu.memory_space<vmem>>, vector<32x4xf32>
    %cst_7 = arith.constant dense<0.000000e+00> : vector<8x4xf32>
    %8 = tpu.matmul %6, %7, %cst_7 {dimension_numbers = #tpu.dot_dimension_numbers<[1], [0], [0], [1], [0, 0, 1, 1], [], []>} : vector<8x32xf32>, vector<32x4xf32>, vector<8x4xf32> -> vector<8x4xf32>
    %c0_8 = arith.constant 0 : index
    %c0_9 = arith.constant 0 : index
    %9 = vector.load %arg5[%c0_8, %c0_9] : memref<1x4xf32, #tpu.memory_space<vmem>>, vector<1x4xf32>
    %10 = vector.broadcast %9 : vector<1x4xf32> to vector<8x4xf32>
    %11 = arith.addf %8, %10 : vector<8x4xf32>
    %c0_10 = arith.constant 0 : index
    %c0_11 = arith.constant 0 : index
    %12 = vector.load %arg6[%c0_10, %c0_11] : memref<8x4xf32, #tpu.memory_space<vmem>>, vector<8x4xf32>
    tpu.vector_store %arg6[%c0_10, %c0_11], %11 {strides = array<i32>} : memref<8x4xf32, #tpu.memory_space<vmem>>, vector<8x4xf32>,
    return
  }
  func.func @transform_0(%arg0: i32) -> (i32, i32) {
    %c0_i32 = arith.constant 0 : i32
    %c0_i32_0 = arith.constant 0 : i32
    return %arg0, %c0_i32 : i32, i32
  }
  func.func @transform_1(%arg0: i32) -> (i32, i32) {
    %c0_i32 = arith.constant 0 : i32
    %c0_i32_0 = arith.constant 0 : i32
    %c0_i32_1 = arith.constant 0 : i32
    return %c0_i32, %c0_i32_0 : i32, i32
  }
  func.func @transform_2(%arg0: i32) -> (i32, i32) {
    %c0_i32 = arith.constant 0 : i32
    %c0_i32_0 = arith.constant 0 : i32
    %c0_i32_1 = arith.constant 0 : i32
    return %c0_i32, %c0_i32_0 : i32, i32
  }
  func.func @transform_3(%arg0: i32) -> (i32, i32) {
    %c0_i32 = arith.constant 0 : i32
    %c0_i32_0 = arith.constant 0 : i32
    %c0_i32_1 = arith.constant 0 : i32
    return %c0_i32, %c0_i32_0 : i32, i32
  }
  func.func @transform_4(%arg0: i32) -> (i32, i32) {
    %c0_i32 = arith.constant 0 : i32
    %c0_i32_0 = arith.constant 0 : i32
    %c0_i32_1 = arith.constant 0 : i32
    return %c0_i32, %c0_i32_0 : i32, i32
  }
  func.func @transform_5(%arg0: i32) -> (i32, i32) {
    %c0_i32 = arith.constant 0 : i32
    %c0_i32_0 = arith.constant 0 : i32
    return %arg0, %c0_i32 : i32, i32
  }
}

</mosaic_0001>

<llo_original>
// kernel: instantiator_output.1
$region0: #{instantiator_output.1}
  #allocation0 [shape = 'u32[]', space=smem, size = 0x4, offset = 0x4, fixed_abs, tag = 'smem constant byte address 0x4 - core index']
  #allocation1 [shape = 'u32[72,128]{1,0:T(1,128)}', space=vmem, size = 0x9000, scoped, tag = 'internal scratch']
  %s0 = inlined_call_operand.hbm [shape: f32[8,32], index: 0, kind: input, shape index: {}]
  %s1 = inlined_call_operand.vmem [shape: f32[32,32], index: 1, kind: input, shape index: {}]
  %s2 = inlined_call_operand.vmem [shape: f32[1,32], index: 2, kind: input, shape index: {}]
  %s3 = inlined_call_operand.vmem [shape: f32[32,4], index: 3, kind: input, shape index: {}]
  %s4 = inlined_call_operand.vmem [shape: f32[1,4], index: 4, kind: input, shape index: {}]
  %s5 = inlined_call_operand.vmem [shape: f32[8,4], index: 5, kind: output, shape index: {}]
  %s6 = sld [smem:[#allocation0]]
  $region34: #{instantiator_output.1} parent=0
    _
  %s8 = ssub.s32 1, %s6
  %s9 = scalar_select 0, %s8, %s6
  $region1: #{instantiator_output.1} parent=0
    #allocation2 [shape = 'u8[4096]{0}', space=vmem, size = 0x1000, scoped, tag = 'input window, operand 0, single buffered']
    #allocation3 [shape = 's32[1]{0}', space=sflag, size = 0x4, scoped, tag = 'scoped memory for instantiator_output.1']
    %10 = vsyncpa [#allocation3], 0
    // Predicated region
    $region2: #{instantiator_output.1} parent=1 // pred_check
      _
    $region3: #{instantiator_output.1} parent=1 // pred_check_branch
      %12 = sbr.rel (0) target = $region5
    $region4: #{instantiator_output.1} parent=1 // pred_region
      %14 = vsyncadd [#allocation3], 0
      %s16 = sshll.u32 %s0, 4
      %s17 = int_to_ptr.hbm [resolvable:$true] %s16
      %s18 = sshll.u32 [#allocation2], 4
      %s19 = int_to_ptr.vmem [resolvable:$true] %s18
      %21 = dma.hbm_to_vmem [thread:$0]  %s17, 128, %s19, [#allocation3]
    $region5: #{instantiator_output.1} parent=1 // pred_fallthru
      _
    // Predicated region
    $region6: #{instantiator_output.1} parent=1 // pred_check
      _
    $region7: #{instantiator_output.1} parent=1 // pred_check_branch
      %23 = sbr.rel (0) target = $region9
    $region8: #{instantiator_output.1} parent=1 // pred_region
      _
    $region9: #{instantiator_output.1} parent=1 // pred_fallthru
      _
    // Predicated region
    $region10: #{instantiator_output.1} parent=1 // pred_check
      _
    $region11: #{instantiator_output.1} parent=1 // pred_check_branch
      %25 = sbr.rel (0) target = $region13
    $region12: #{instantiator_output.1} parent=1 // pred_region
      _
    $region13: #{instantiator_output.1} parent=1 // pred_fallthru
      _
    // Predicated region
    $region14: #{instantiator_output.1} parent=1 // pred_check
      _
    $region15: #{instantiator_output.1} parent=1 // pred_check_branch
      %27 = sbr.rel (0) target = $region17
    $region16: #{instantiator_output.1} parent=1 // pred_region
      _
    $region17: #{instantiator_output.1} parent=1 // pred_fallthru
      _
    // Predicated region
    $region18: #{instantiator_output.1} parent=1 // pred_check
      _
    $region19: #{instantiator_output.1} parent=1 // pred_check_branch
      %29 = sbr.rel (0) target = $region21
    $region20: #{instantiator_output.1} parent=1 // pred_region
      _
    $region21: #{instantiator_output.1} parent=1 // pred_fallthru
      _
    // Predicated region
    $region22: #{instantiator_output.1} parent=1 // pred_check
      _
    $region23: #{instantiator_output.1} parent=1 // pred_check_branch
      %31 = sbr.rel (0) target = $region25
    $region24: #{instantiator_output.1} parent=1 // pred_region
      %33 = dma.done [#allocation3], 128
    $region25: #{instantiator_output.1} parent=1 // pred_fallthru
      _
    %v34 = vld [vmem:[#allocation2] sm:$0xff]
    %v35 = vld [vmem:[%s1] sm:$0xff]
    %v36 = vld [vmem:[%s1 + $0x8] sm:$0xff]
    %v37 = vld [vmem:[%s1 + $0x10] sm:$0xff]
    %v38 = vld [vmem:[%s1 + $0x18] sm:$0xff]
    %v39 = vld [vmem:[%s2] sm:$0x1]
    %v41 = vperm.slane %v39, 0
    %vm43 = vcmask 261120
    %v45 = vsel %vm43, %v34, 0
    %47 = vmatpush.msra.mxu0 0.0
    %48 = vmatpush.msra.mxu0 0.0
    %49 = vmatpush.msra.mxu0 0.0
    %50 = vmatpush.msra.mxu0 0.0
    %51 = vmatpush.msra.mxu0 0.0
    %52 = vmatpush.msra.mxu0 0.0
    %53 = vmatpush.msra.mxu0 0.0
    %54 = vmatpush.msra.mxu0 0.0
    %55 = vmatpush.msra.mxu0 0.0
    %56 = vmatpush.msra.mxu0 0.0
    %57 = vmatpush.msra.mxu0 0.0
    %58 = vmatpush.msra.mxu0 0.0
    %59 = vmatpush.msra.mxu0 %v38
    %60 = vmatpush.msra.mxu0 %v37
    %61 = vmatpush.msra.mxu0 %v36
    %62 = vmatpush.msra.mxu0 %v35
    %63 = vmatmul.f32.gmra.mxu0 %v45
    %v64 = vpop.f32.mrf.mxu0
    %v65 = vadd.f32 %v41, %v64
    %66 = vdwg.mxu0
    %v67 = vtanh.pop %v65
    %v68 = vld [vmem:[%s3] sm:$0xff]
    %v69 = vld [vmem:[%s3 + $0x8] sm:$0xff]
    %v70 = vld [vmem:[%s3 + $0x10] sm:$0xff]
    %v71 = vld [vmem:[%s3 + $0x18] sm:$0xff]
    %v72 = vld [vmem:[%s4] sm:$0x1]
    %v74 = vperm.slane %v72, 0
    %v77 = vsel %vm43, %v67, 0
    %79 = vmatpush.msra.mxu0 0.0
    %80 = vmatpush.msra.mxu0 0.0
    %81 = vmatpush.msra.mxu0 0.0
    %82 = vmatpush.msra.mxu0 0.0
    %83 = vmatpush.msra.mxu0 0.0
    %84 = vmatpush.msra.mxu0 0.0
    %85 = vmatpush.msra.mxu0 0.0
    %86 = vmatpush.msra.mxu0 0.0
    %87 = vmatpush.msra.mxu0 0.0
    %88 = vmatpush.msra.mxu0 0.0
    %89 = vmatpush.msra.mxu0 0.0
    %90 = vmatpush.msra.mxu0 0.0
    %91 = vmatpush.msra.mxu0 %v71
    %92 = vmatpush.msra.mxu0 %v70
    %93 = vmatpush.msra.mxu0 %v69
    %94 = vmatpush.msra.mxu0 %v68
    %95 = vmatmul.f32.gmra.mxu0 %v77
    %v96 = vpop.f32.mrf.mxu0
    %v97 = vadd.f32 %v74, %v96
    %98 = vdwg.mxu0
    %vm99 = vcmask 31744
    %100 = vst.msk [vmem:[%s5] sm:$0xff] %vm99, %v97
    // Predicated region
    $region26: #{instantiator_output.1} parent=1 // pred_check
      _
    $region27: #{instantiator_output.1} parent=1 // pred_check_branch
      %102 = sbr.rel (0) target = $region29
    $region28: #{instantiator_output.1} parent=1 // pred_region
      _
    $region29: #{instantiator_output.1} parent=1 // pred_fallthru
      _
    // Predicated region
    $region30: #{instantiator_output.1} parent=1 // pred_check
      _
    $region31: #{instantiator_output.1} parent=1 // pred_check_branch
      %104 = sbr.rel (0) target = $region33
    $region32: #{instantiator_output.1} parent=1 // pred_region
      _
    $region33: #{instantiator_output.1} parent=1 // pred_fallthru
      _
    %105 = vsyncpa [#allocation3], 1

</llo_original>
